<compile_context>
chip_gen: v5e
topology: v5e:2x2
jax: 0.10.0
libtpu: 0.0.40
codegen_flags: <defaults>
</compile_context>

<pallas_src>
import jax
import jax.numpy as jnp
from jax.experimental import pallas as pl
from jax.experimental.pallas import tpu as pltpu

BN_EPS = 1e-5
F_IN = 120     # BatchNorm1d(120) pins the input feature dim
H1, H2 = 256, 128
N_OUT = 50
N_PAD = 128    # lane-aligned fc3 output width (zero cols, ReLU(0)=0)


def _round_up(x, m):
    return (x + m - 1) // m * m


def classifier_kernel(x_ref, w1_ref, b1_ref, w2_ref, b2_ref, w3_ref, b3_ref, o_ref):
    # BN already folded into (w1, b1). Three matmul+ReLU stages; all weights are
    # VMEM-resident across grid steps, accumulation in f32 on the MXU.
    dt = w1_ref.dtype
    x = x_ref[...].astype(dt)                                          # (TB, 120)
    h1 = jnp.dot(x, w1_ref[...], preferred_element_type=jnp.float32) + b1_ref[...]
    h1 = jnp.maximum(h1, 0.0).astype(dt)
    h2 = jnp.dot(h1, w2_ref[...], preferred_element_type=jnp.float32) + b2_ref[...]
    h2 = jnp.maximum(h2, 0.0).astype(dt)
    h3 = jnp.dot(h2, w3_ref[...], preferred_element_type=jnp.float32) + b3_ref[...]
    o_ref[...] = jnp.maximum(h3, 0.0).astype(o_ref.dtype)              # (TB, 128)


def prepare_params(params, compute_dtype=jnp.bfloat16):
    """Fold eval BatchNorm into fc1, pad fc3 to lane width, cast matmul operands."""
    scale = jax.lax.rsqrt(params["running_var"] + BN_EPS)                # (1, 120)
    w1 = params["w1"] * scale.reshape(-1, 1)                             # (120, 256)
    b1 = params["b1"] - (params["running_mean"] * scale) @ params["w1"]  # (1, 256)
    # Pad fc3 output 50 -> 128 lanes (zero columns stay zero through the ReLU).
    w3 = jnp.pad(params["w3"], ((0, 0), (0, N_PAD - N_OUT)))
    b3 = jnp.pad(params["b3"], ((0, 0), (0, N_PAD - N_OUT)))
    return {
        "w1": w1.astype(compute_dtype), "b1": b1.astype(jnp.float32),
        "w2": params["w2"].astype(compute_dtype), "b2": params["b2"].astype(jnp.float32),
        "w3": w3.astype(compute_dtype), "b3": b3.astype(jnp.float32),
        "compute_dtype": compute_dtype,
    }


def classifier_forward(x, prepared, max_tile_b=2048):
    """x: (B, 120) float32. prepared: output of prepare_params(). Returns (B, 50) f32."""
    B, F = x.shape
    assert F == F_IN, f"expected {F_IN} input features, got {F}"
    dt = prepared["compute_dtype"]

    # Tile selection: 16-aligned (bf16 packed tile), capped so there are >= 2 grid
    # steps when B allows (keeps both v7x TensorCores busy; free on v5e/v6e), and
    # never larger than the (8-rounded) batch itself.
    tile_b = min(max_tile_b, _round_up(pl.cdiv(B, 2), 16), _round_up(B, 8))
    tile_b = max(8, tile_b)
    grid_b = pl.cdiv(B, tile_b)   # partial last block: OOB rows computed & discarded

    w_item = jnp.dtype(dt).itemsize
    flops = 2 * B * (F_IN * H1 + H1 * H2 + H2 * N_OUT)
    bytes_accessed = (
        B * F_IN * x.dtype.itemsize                 # x read once, directly
        + B * N_PAD * w_item                        # lane-dense narrow output
        + (F_IN * H1 + H1 * H2 + H2 * N_PAD) * w_item
        + (H1 + H2 + N_PAD) * 4                     # f32 biases
    )

    const = lambda i: (0, 0)                        # weights stay resident per tile
    out = pl.pallas_call(
        classifier_kernel,
        out_shape=jax.ShapeDtypeStruct((B, N_PAD), dt),
        grid=(grid_b,),
        in_specs=[
            pl.BlockSpec((tile_b, F_IN), lambda i: (i, 0)),   # x: batch-tiled, f32
            pl.BlockSpec((F_IN, H1), const),                  # w1 (BN folded in)
            pl.BlockSpec((1, H1), const),                     # b1
            pl.BlockSpec((H1, H2), const),                    # w2
            pl.BlockSpec((1, H2), const),                     # b2
            pl.BlockSpec((H2, N_PAD), const),                 # w3 (padded to 128)
            pl.BlockSpec((1, N_PAD), const),                  # b3
        ],
        out_specs=pl.BlockSpec((tile_b, N_PAD), lambda i: (i, 0)),
        compiler_params=pltpu.CompilerParams(
            dimension_semantics=("parallel",)),
        cost_estimate=pl.CostEstimate(
            flops=flops, transcendentals=0, bytes_accessed=bytes_accessed),
    )(x, prepared["w1"], prepared["b1"], prepared["w2"], prepared["b2"],
      prepared["w3"], prepared["b3"])
    # Slice off the lane padding outside the kernel; cast back to f32 to match
    # the original module's output dtype (cheap: B x 50 elements).
    return out[:, :N_OUT].astype(jnp.float32)


def init_params(key, input_shape=F_IN):
    """Deterministic synthetic parameters; shapes mirror the PyTorch module."""
    ks = jax.random.split(key, 8)
    # PyTorch nn.Linear stores weight as (out, in); transpose to (in, out) for x @ W.
    w1_pt = jax.random.normal(ks[0], (256, input_shape), jnp.float32) * 0.05
    b1 = jax.random.normal(ks[1], (1, 256), jnp.float32) * 0.05
    w2_pt = jax.random.normal(ks[2], (128, 256), jnp.float32) * 0.05
    b2 = jax.random.normal(ks[3], (1, 128), jnp.float32) * 0.05
    w3_pt = jax.random.normal(ks[4], (50, 128), jnp.float32) * 0.05
    b3 = jax.random.normal(ks[5], (1, 50), jnp.float32) * 0.05
    running_mean = jax.random.normal(ks[6], (1, input_shape), jnp.float32) * 0.1
    running_var = jax.nn.softplus(jax.random.normal(ks[7], (1, input_shape), jnp.float32)) + 0.5
    return {
        "running_mean": running_mean,
        "running_var": running_var,
        "w1": w1_pt.T, "b1": b1,
        "w2": w2_pt.T, "b2": b2,
        "w3": w3_pt.T, "b3": b3,
    }


def _reference_forward(x, p):
    xn = (x - p["running_mean"]) / jnp.sqrt(p["running_var"] + BN_EPS)
    h1 = jnp.maximum(xn @ p["w1"] + p["b1"], 0.0)
    h2 = jnp.maximum(h1 @ p["w2"] + p["b2"], 0.0)
    return jnp.maximum(h2 @ p["w3"] + p["b3"], 0.0)


if __name__ == "__main__":
    key = jax.random.PRNGKey(0)
    k_x, k_p, k_x2, k_x3 = jax.random.split(key, 4)

    B, F = 8, F_IN
    x = jax.random.normal(k_x, (B, F), jnp.float32)
    params = init_params(k_p, input_shape=F)
    ref = _reference_forward(x, params)

    # f32 compute path: tight check against the pure-JAX reference.
    out_f32 = jax.block_until_ready(
        classifier_forward(x, prepare_params(params, jnp.float32)))
    assert out_f32.shape == (B, N_OUT)
    assert jnp.allclose(out_f32, ref, atol=1e-4, rtol=1e-4), "f32 mismatch vs reference"

    # bf16 path (default): bf16 matmuls + bf16 store, f32 MXU accumulation.
    out_bf16 = jax.block_until_ready(classifier_forward(x, prepare_params(params)))
    assert out_bf16.shape == (B, N_OUT)
    assert jnp.allclose(out_bf16, ref, atol=3e-2, rtol=3e-2), "bf16 mismatch vs reference"

    # Multi-step batch grid with a partial last block (B=24, tile=16 -> grid 2).
    B2 = 24
    x2 = jax.random.normal(k_x2, (B2, F), jnp.float32)
    ref2 = _reference_forward(x2, params)
    out2 = jax.block_until_ready(
        classifier_forward(x2, prepare_params(params), max_tile_b=16))
    assert out2.shape == (B2, N_OUT)
    assert jnp.allclose(out2, ref2, atol=3e-2, rtol=3e-2), "partial-block mismatch"

    # Default tile-selection path: B=64 -> tile 32, grid 2 exact.
    B3 = 64
    x3 = jax.random.normal(k_x3, (B3, F), jnp.float32)
    ref3 = _reference_forward(x3, params)
    out3 = jax.block_until_ready(classifier_forward(x3, prepare_params(params)))
    assert out3.shape == (B3, N_OUT)
    assert jnp.allclose(out3, ref3, atol=3e-2, rtol=3e-2), "grid-path mismatch"

    print("KERNEL_OK")
</pallas_src>

<mosaic_0001>
module attributes {stable_mosaic.version = 11 : i64} {
  func.func @classifier_kernel(%arg0: i32, %arg1: memref<8x120xf32, #tpu.memory_space<vmem>>, %arg2: memref<120x256xf32, #tpu.memory_space<vmem>>, %arg3: memref<1x256xf32, #tpu.memory_space<vmem>>, %arg4: memref<256x128xf32, #tpu.memory_space<vmem>>, %arg5: memref<1x128xf32, #tpu.memory_space<vmem>>, %arg6: memref<128x128xf32, #tpu.memory_space<vmem>>, %arg7: memref<1x128xf32, #tpu.memory_space<vmem>>, %arg8: memref<8x128xf32, #tpu.memory_space<vmem>>) attributes {dimension_semantics = [#tpu.dimension_semantics<parallel>], iteration_bounds = array<i64: 1>, scalar_prefetch = 0 : i64, scratch_operands = 0 : i64, tpu.core_type = #tpu.core_type<tc>, window_params = [{transform_indices = @transform_0, window_bounds = array<i64: 8, 120>}, {pipeline_mode = #tpu.pipeline_mode<synchronous>, transform_indices = @transform_1, window_bounds = array<i64: 120, 256>}, {pipeline_mode = #tpu.pipeline_mode<synchronous>, transform_indices = @transform_2, window_bounds = array<i64: 1, 256>}, {pipeline_mode = #tpu.pipeline_mode<synchronous>, transform_indices = @transform_3, window_bounds = array<i64: 256, 128>}, {pipeline_mode = #tpu.pipeline_mode<synchronous>, transform_indices = @transform_4, window_bounds = array<i64: 1, 128>}, {pipeline_mode = #tpu.pipeline_mode<synchronous>, transform_indices = @transform_5, window_bounds = array<i64: 128, 128>}, {pipeline_mode = #tpu.pipeline_mode<synchronous>, transform_indices = @transform_6, window_bounds = array<i64: 1, 128>}, {transform_indices = @transform_7, window_bounds = array<i64: 8, 128>}]} {
    %c0 = arith.constant 0 : index
    %c0_0 = arith.constant 0 : index
    %0 = vector.load %arg1[%c0, %c0_0] : memref<8x120xf32, #tpu.memory_space<vmem>>, vector<8x120xf32>
    %c0_1 = arith.constant 0 : index
    %c0_2 = arith.constant 0 : index
    %1 = vector.load %arg2[%c0_1, %c0_2] : memref<120x256xf32, #tpu.memory_space<vmem>>, vector<120x256xf32>
    %cst = arith.constant dense<0.000000e+00> : vector<8x256xf32>
    %2 = tpu.matmul %0, %1, %cst {dimension_numbers = #tpu.dot_dimension_numbers<[1], [0], [0], [1], [0, 0, 1, 1], [], []>} : vector<8x120xf32>, vector<120x256xf32>, vector<8x256xf32> -> vector<8x256xf32>
    %c0_3 = arith.constant 0 : index
    %c0_4 = arith.constant 0 : index
    %3 = vector.load %arg3[%c0_3, %c0_4] : memref<1x256xf32, #tpu.memory_space<vmem>>, vector<1x256xf32>
    %4 = vector.broadcast %3 : vector<1x256xf32> to vector<8x256xf32>
    %5 = arith.addf %2, %4 : vector<8x256xf32>
    %cst_5 = arith.constant 0.000000e+00 : f32
    %6 = vector.broadcast %cst_5 : f32 to vector<8x256xf32>
    %7 = arith.maximumf %5, %6 : vector<8x256xf32>
    %c0_6 = arith.constant 0 : index
    %c0_7 = arith.constant 0 : index
    %8 = vector.load %arg4[%c0_6, %c0_7] : memref<256x128xf32, #tpu.memory_space<vmem>>, vector<256x128xf32>
    %cst_8 = arith.constant dense<0.000000e+00> : vector<8x128xf32>
    %9 = tpu.matmul %7, %8, %cst_8 {dimension_numbers = #tpu.dot_dimension_numbers<[1], [0], [0], [1], [0, 0, 1, 1], [], []>} : vector<8x256xf32>, vector<256x128xf32>, vector<8x128xf32> -> vector<8x128xf32>
    %c0_9 = arith.constant 0 : index
    %c0_10 = arith.constant 0 : index
    %10 = vector.load %arg5[%c0_9, %c0_10] : memref<1x128xf32, #tpu.memory_space<vmem>>, vector<1x128xf32>
    %11 = vector.broadcast %10 : vector<1x128xf32> to vector<8x128xf32>
    %12 = arith.addf %9, %11 : vector<8x128xf32>
    %cst_11 = arith.constant 0.000000e+00 : f32
    %13 = vector.broadcast %cst_11 : f32 to vector<8x128xf32>
    %14 = arith.maximumf %12, %13 : vector<8x128xf32>
    %c0_12 = arith.constant 0 : index
    %c0_13 = arith.constant 0 : index
    %15 = vector.load %arg6[%c0_12, %c0_13] : memref<128x128xf32, #tpu.memory_space<vmem>>, vector<128x128xf32>
    %cst_14 = arith.constant dense<0.000000e+00> : vector<8x128xf32>
    %16 = tpu.matmul %14, %15, %cst_14 {dimension_numbers = #tpu.dot_dimension_numbers<[1], [0], [0], [1], [0, 0, 1, 1], [], []>} : vector<8x128xf32>, vector<128x128xf32>, vector<8x128xf32> -> vector<8x128xf32>
    %c0_15 = arith.constant 0 : index
    %c0_16 = arith.constant 0 : index
    %17 = vector.load %arg7[%c0_15, %c0_16] : memref<1x128xf32, #tpu.memory_space<vmem>>, vector<1x128xf32>
    %18 = vector.broadcast %17 : vector<1x128xf32> to vector<8x128xf32>
    %19 = arith.addf %16, %18 : vector<8x128xf32>
    %cst_17 = arith.constant 0.000000e+00 : f32
    %20 = vector.broadcast %cst_17 : f32 to vector<8x128xf32>
    %21 = arith.maximumf %19, %20 : vector<8x128xf32>
    %c0_18 = arith.constant 0 : index
    %c0_19 = arith.constant 0 : index
    %22 = vector.load %arg8[%c0_18, %c0_19] : memref<8x128xf32, #tpu.memory_space<vmem>>, vector<8x128xf32>
    tpu.vector_store %arg8[%c0_18, %c0_19], %21 {strides = array<i32>} : memref<8x128xf32, #tpu.memory_space<vmem>>, vector<8x128xf32>,
    return
  }
  func.func @transform_0(%arg0: i32) -> (i32, i32) {
    %c0_i32 = arith.constant 0 : i32
    %c0_i32_0 = arith.constant 0 : i32
    return %arg0, %c0_i32 : i32, i32
  }
  func.func @transform_1(%arg0: i32) -> (i32, i32) {
    %c0_i32 = arith.constant 0 : i32
    %c0_i32_0 = arith.constant 0 : i32
    %c0_i32_1 = arith.constant 0 : i32
    return %c0_i32, %c0_i32_0 : i32, i32
  }
  func.func @transform_2(%arg0: i32) -> (i32, i32) {
    %c0_i32 = arith.constant 0 : i32
    %c0_i32_0 = arith.constant 0 : i32
    %c0_i32_1 = arith.constant 0 : i32
    return %c0_i32, %c0_i32_0 : i32, i32
  }
  func.func @transform_3(%arg0: i32) -> (i32, i32) {
    %c0_i32 = arith.constant 0 : i32
    %c0_i32_0 = arith.constant 0 : i32
    %c0_i32_1 = arith.constant 0 : i32
    return %c0_i32, %c0_i32_0 : i32, i32
  }
  func.func @transform_4(%arg0: i32) -> (i32, i32) {
    %c0_i32 = arith.constant 0 : i32
    %c0_i32_0 = arith.constant 0 : i32
    %c0_i32_1 = arith.constant 0 : i32
    return %c0_i32, %c0_i32_0 : i32, i32
  }
  func.func @transform_5(%arg0: i32) -> (i32, i32) {
    %c0_i32 = arith.constant 0 : i32
    %c0_i32_0 = arith.constant 0 : i32
    %c0_i32_1 = arith.constant 0 : i32
    return %c0_i32, %c0_i32_0 : i32, i32
  }
  func.func @transform_6(%arg0: i32) -> (i32, i32) {
    %c0_i32 = arith.constant 0 : i32
    %c0_i32_0 = arith.constant 0 : i32
    %c0_i32_1 = arith.constant 0 : i32
    return %c0_i32, %c0_i32_0 : i32, i32
  }
  func.func @transform_7(%arg0: i32) -> (i32, i32) {
    %c0_i32 = arith.constant 0 : i32
    %c0_i32_0 = arith.constant 0 : i32
    return %arg0, %c0_i32 : i32, i32
  }
}

</mosaic_0001>

<llo_original>
// kernel: tpu_custom_call.1
$region0: #{tpu_custom_call.1}
  #allocation0 [shape = 'u32[]', space=smem, size = 0x4, offset = 0x4, fixed_abs, tag = 'smem constant byte address 0x4 - core index']
  #allocation1 [shape = 'u32[72,128]{1,0:T(1,128)}', space=vmem, size = 0x9000, scoped, tag = 'internal scratch']
  %s0 = inlined_call_operand.hbm [shape: f32[8,120], index: 0, kind: input, shape index: {}]
  %s1 = inlined_call_operand.hbm [shape: f32[120,256], index: 1, kind: input, shape index: {}]
  %s2 = inlined_call_operand.hbm [shape: f32[1,256], index: 2, kind: input, shape index: {}]
  %s3 = inlined_call_operand.hbm [shape: f32[256,128], index: 3, kind: input, shape index: {}]
  %s4 = inlined_call_operand.vmem [shape: f32[1,128], index: 4, kind: input, shape index: {}]
  %s5 = inlined_call_operand.hbm [shape: f32[128,128], index: 5, kind: input, shape index: {}]
  %s6 = inlined_call_operand.vmem [shape: f32[1,128], index: 6, kind: input, shape index: {}]
  %s7 = inlined_call_operand.hbm [shape: f32[8,128], index: 7, kind: output, shape index: {}]
  %s8 = sld [smem:[#allocation0]]
  $region58: #{tpu_custom_call.1} parent=0
    _
  %s10 = ssub.s32 1, %s8
  %s11 = scalar_select 0, %s10, %s8
  $region1: #{tpu_custom_call.1} parent=0
    #allocation2 [shape = 'u8[4096]{0}', space=vmem, size = 0x1000, scoped, tag = 'input window, operand 0, single buffered']
    #allocation3 [shape = 's32[1]{0}', space=sflag, size = 0x4, scoped, tag = 'scoped memory for tpu_custom_call.1']
    #allocation4 [shape = 's32[1]{0}', space=sflag, size = 0x4, scoped, tag = 'scoped memory for tpu_custom_call.1']
    #allocation5 [shape = 'u8[122880]{0}', space=vmem, size = 0x1e000, scoped, tag = 'input window, operand 1, single buffered']
    #allocation6 [shape = 's32[1]{0}', space=sflag, size = 0x4, scoped, tag = 'scoped memory for tpu_custom_call.1']
    #allocation7 [shape = 'u8[1024]{0}', space=vmem, size = 0x400, scoped, tag = 'input window, operand 2, single buffered']
    #allocation8 [shape = 'u8[131072]{0}', space=vmem, size = 0x20000, scoped, tag = 'input window, operand 3, single buffered']
    #allocation9 [shape = 's32[1]{0}', space=sflag, size = 0x4, scoped, tag = 'scoped memory for tpu_custom_call.1']
    #allocation10 [shape = 'u8[65536]{0}', space=vmem, size = 0x10000, scoped, tag = 'input window, operand 5, single buffered']
    #allocation11 [shape = 'u8[4096]{0}', space=vmem, size = 0x1000, scoped, tag = 'output window, operand 0, single buffered']
    %12 = vsyncpa [#allocation3], 0
    %13 = vsyncpa [#allocation6], 0
    %14 = vsyncpa [#allocation9], 0
    %15 = vsyncpa [#allocation4], 0
    // Predicated region
    $region2: #{tpu_custom_call.1} parent=1 // pred_check
      _
    $region3: #{tpu_custom_call.1} parent=1 // pred_check_branch
      %17 = sbr.rel (0) target = $region5
    $region4: #{tpu_custom_call.1} parent=1 // pred_region
      %19 = vsyncadd [#allocation3], 0
      %s21 = sshll.u32 %s0, 4
      %s22 = int_to_ptr.hbm [resolvable:$true] %s21
      %s23 = sshll.u32 [#allocation2], 4
      %s24 = int_to_ptr.vmem [resolvable:$true] %s23
      %26 = dma.hbm_to_vmem [thread:$0]  %s22, 128, %s24, [#allocation3]
    $region5: #{tpu_custom_call.1} parent=1 // pred_fallthru
      _
    // Predicated region
    $region6: #{tpu_custom_call.1} parent=1 // pred_check
      _
    $region7: #{tpu_custom_call.1} parent=1 // pred_check_branch
      %28 = sbr.rel (0) target = $region9
    $region8: #{tpu_custom_call.1} parent=1 // pred_region
      %30 = vsyncadd [#allocation6], 0
      %s31 = sshll.u32 %s1, 4
      %s32 = int_to_ptr.hbm [resolvable:$true] %s31
      %s33 = sshll.u32 [#allocation5], 4
      %s34 = int_to_ptr.vmem [resolvable:$true] %s33
      %39 = dma.hbm_to_vmem [thread:$0]  %s32, 3840, %s34, [#allocation6], 256, 256, 16
    $region9: #{tpu_custom_call.1} parent=1 // pred_fallthru
      _
    // Predicated region
    $region10: #{tpu_custom_call.1} parent=1 // pred_check
      _
    $region11: #{tpu_custom_call.1} parent=1 // pred_check_branch
      %41 = sbr.rel (0) target = $region13
    $region12: #{tpu_custom_call.1} parent=1 // pred_region
      %43 = vsyncadd [#allocation6], 0
      %s45 = sshll.u32 %s2, 4
      %s46 = int_to_ptr.hbm [resolvable:$true] %s45
      %s47 = sshll.u32 [#allocation7], 4
      %s48 = int_to_ptr.vmem [resolvable:$true] %s47
      %50 = dma.hbm_to_vmem [thread:$0]  %s46, 32, %s48, [#allocation6]
    $region13: #{tpu_custom_call.1} parent=1 // pred_fallthru
      _
    // Predicated region
    $region14: #{tpu_custom_call.1} parent=1 // pred_check
      _
    $region15: #{tpu_custom_call.1} parent=1 // pred_check_branch
      %52 = sbr.rel (0) target = $region17
    $region16: #{tpu_custom_call.1} parent=1 // pred_region
      %54 = vsyncadd [#allocation9], 0
      %s55 = sshll.u32 %s3, 4
      %s56 = int_to_ptr.hbm [resolvable:$true] %s55
      %s57 = sshll.u32 [#allocation8], 4
      %s58 = int_to_ptr.vmem [resolvable:$true] %s57
      %63 = dma.hbm_to_vmem [thread:$0]  %s56, 4096, %s58, [#allocation9], 128, 128, 8
    $region17: #{tpu_custom_call.1} parent=1 // pred_fallthru
      _
    // Predicated region
    $region18: #{tpu_custom_call.1} parent=1 // pred_check
      _
    $region19: #{tpu_custom_call.1} parent=1 // pred_check_branch
      %65 = sbr.rel (0) target = $region21
    $region20: #{tpu_custom_call.1} parent=1 // pred_region
      _
    $region21: #{tpu_custom_call.1} parent=1 // pred_fallthru
      _
    // Predicated region
    $region22: #{tpu_custom_call.1} parent=1 // pred_check
      _
    $region23: #{tpu_custom_call.1} parent=1 // pred_check_branch
      %67 = sbr.rel (0) target = $region25
    $region24: #{tpu_custom_call.1} parent=1 // pred_region
      %69 = vsyncadd [#allocation9], 0
      %s70 = sshll.u32 %s5, 4
      %s71 = int_to_ptr.hbm [resolvable:$true] %s70
      %s72 = sshll.u32 [#allocation10], 4
      %s73 = int_to_ptr.vmem [resolvable:$true] %s72
      %78 = dma.hbm_to_vmem [thread:$0]  %s71, 2048, %s73, [#allocation9], 128, 128, 8
    $region25: #{tpu_custom_call.1} parent=1 // pred_fallthru
      _
    // Predicated region
    $region26: #{tpu_custom_call.1} parent=1 // pred_check
      _
    $region27: #{tpu_custom_call.1} parent=1 // pred_check_branch
      %80 = sbr.rel (0) target = $region29
    $region28: #{tpu_custom_call.1} parent=1 // pred_region
      _
    $region29: #{tpu_custom_call.1} parent=1 // pred_fallthru
      _
    // Predicated region
    $region30: #{tpu_custom_call.1} parent=1 // pred_check
      _
    $region31: #{tpu_custom_call.1} parent=1 // pred_check_branch
      %82 = sbr.rel (0) target = $region33
    $region32: #{tpu_custom_call.1} parent=1 // pred_region
      %84 = dma.done [#allocation3], 128
    $region33: #{tpu_custom_call.1} parent=1 // pred_fallthru
      _
    // Predicated region
    $region34: #{tpu_custom_call.1} parent=1 // pred_check
      _
    $region35: #{tpu_custom_call.1} parent=1 // pred_check_branch
      %86 = sbr.rel (0) target = $region37
    $region36: #{tpu_custom_call.1} parent=1 // pred_region
      %88 = dma.done [#allocation6], 3840
    $region37: #{tpu_custom_call.1} parent=1 // pred_fallthru
      _
    // Predicated region
    $region38: #{tpu_custom_call.1} parent=1 // pred_check
      _
    $region39: #{tpu_custom_call.1} parent=1 // pred_check_branch
      %90 = sbr.rel (0) target = $region41
    $region40: #{tpu_custom_call.1} parent=1 // pred_region
      %92 = dma.done [#allocation6], 32
    $region41: #{tpu_custom_call.1} parent=1 // pred_fallthru
      _
    // Predicated region
    $region42: #{tpu_custom_call.1} parent=1 // pred_check
      _
    $region43: #{tpu_custom_call.1} parent=1 // pred_check_branch
      %94 = sbr.rel (0) target = $region45
    $region44: #{tpu_custom_call.1} parent=1 // pred_region
      %96 = dma.done [#allocation9], 4096
    $region45: #{tpu_custom_call.1} parent=1 // pred_fallthru
      _
    // Predicated region
    $region46: #{tpu_custom_call.1} parent=1 // pred_check
      _
    $region47: #{tpu_custom_call.1} parent=1 // pred_check_branch
      %98 = sbr.rel (0) target = $region49
    $region48: #{tpu_custom_call.1} parent=1 // pred_region
      %100 = dma.done [#allocation9], 2048
    $region49: #{tpu_custom_call.1} parent=1 // pred_fallthru
      _
    %v101 = vld [vmem:[#allocation2] sm:$0xff]
    %v102 = vld [vmem:[#allocation5] sm:$0xff]
    %v103 = vld [vmem:[#allocation5 + $0x8] sm:$0xff]
    %v104 = vld [vmem:[#allocation5 + $0x10] sm:$0xff]
    %v105 = vld [vmem:[#allocation5 + $0x18] sm:$0xff]
    %v106 = vld [vmem:[#allocation5 + $0x20] sm:$0xff]
    %v107 = vld [vmem:[#allocation5 + $0x28] sm:$0xff]
    %v108 = vld [vmem:[#allocation5 + $0x30] sm:$0xff]
    %v109 = vld [vmem:[#allocation5 + $0x38] sm:$0xff]
    %v110 = vld [vmem:[#allocation5 + $0x40] sm:$0xff]
    %v111 = vld [vmem:[#allocation5 + $0x48] sm:$0xff]
    %v112 = vld [vmem:[#allocation5 + $0x50] sm:$0xff]
    %v113 = vld [vmem:[#allocation5 + $0x58] sm:$0xff]
    %v114 = vld [vmem:[#allocation5 + $0x60] sm:$0xff]
    %v115 = vld [vmem:[#allocation5 + $0x68] sm:$0xff]
    %v116 = vld [vmem:[#allocation5 + $0x70] sm:$0xff]
    %v117 = vld [vmem:[#allocation5 + $0x78] sm:$0xff]
    %v118 = vld [vmem:[#allocation5 + $0x80] sm:$0xff]
    %v119 = vld [vmem:[#allocation5 + $0x88] sm:$0xff]
    %v120 = vld [vmem:[#allocation5 + $0x90] sm:$0xff]
    %v121 = vld [vmem:[#allocation5 + $0x98] sm:$0xff]
    %v122 = vld [vmem:[#allocation5 + $0xa0] sm:$0xff]
    %v123 = vld [vmem:[#allocation5 + $0xa8] sm:$0xff]
    %v124 = vld [vmem:[#allocation5 + $0xb0] sm:$0xff]
    %v125 = vld [vmem:[#allocation5 + $0xb8] sm:$0xff]
    %v126 = vld [vmem:[#allocation5 + $0xc0] sm:$0xff]
    %v127 = vld [vmem:[#allocation5 + $0xc8] sm:$0xff]
    %v128 = vld [vmem:[#allocation5 + $0xd0] sm:$0xff]
    %v129 = vld [vmem:[#allocation5 + $0xd8] sm:$0xff]
    %v130 = vld [vmem:[#allocation5 + $0xe0] sm:$0xff]
    %v131 = vld [vmem:[#allocation5 + $0xe8] sm:$0xff]
    %v132 = vld [vmem:[#allocation7] sm:$0x3]
    %v134 = vperm.slane %v132, 0
    %v135 = vperm.slane %v132, 1
    %vm138 = vcmask 982016
    %v140 = vsel %vm138, %v101, 0
    %142 = vmatpush.msra.mxu0 0.0
    %143 = vmatpush.msra.mxu0 %v130
    %144 = vmatpush.msra.mxu0 %v128
    %145 = vmatpush.msra.mxu0 %v126
    %146 = vmatpush.msra.mxu0 %v124
    %147 = vmatpush.msra.mxu0 %v122
    %148 = vmatpush.msra.mxu0 %v120
    %149 = vmatpush.msra.mxu0 %v118
    %150 = vmatpush.msra.mxu0 %v116
    %151 = vmatpush.msra.mxu0 %v114
    %152 = vmatpush.msra.mxu0 %v112
    %153 = vmatpush.msra.mxu0 %v110
    %154 = vmatpush.msra.mxu0 %v108
    %155 = vmatpush.msra.mxu0 %v106
    %156 = vmatpush.msra.mxu0 %v104
    %157 = vmatpush.msra.mxu0 %v102
    %158 = vmatmul.f32.gmra.mxu0 %v140
    %v159 = vpop.f32.mrf.mxu0
    %v160 = vadd.f32 %v134, %v159
    %161 = vdwg.mxu0
    %162 = vmatpush.msra.mxu0 0.0
    %163 = vmatpush.msra.mxu0 %v131
    %164 = vmatpush.msra.mxu0 %v129
    %165 = vmatpush.msra.mxu0 %v127
    %166 = vmatpush.msra.mxu0 %v125
    %167 = vmatpush.msra.mxu0 %v123
    %168 = vmatpush.msra.mxu0 %v121
    %169 = vmatpush.msra.mxu0 %v119
    %170 = vmatpush.msra.mxu0 %v117
    %171 = vmatpush.msra.mxu0 %v115
    %172 = vmatpush.msra.mxu0 %v113
    %173 = vmatpush.msra.mxu0 %v111
    %174 = vmatpush.msra.mxu0 %v109
    %175 = vmatpush.msra.mxu0 %v107
    %176 = vmatpush.msra.mxu0 %v105
    %177 = vmatpush.msra.mxu0 %v103
    %178 = vmatmul.f32.gmra.mxu0 %v140
    %v179 = vpop.f32.mrf.mxu0
    %v180 = vadd.f32 %v135, %v179
    %181 = vdwg.mxu0
    %v182 = vmax.f32 %v160, 0.0
    %v183 = vmax.f32 %v180, 0.0
    %v184 = vld [vmem:[#allocation8] sm:$0xff]
    %v185 = vld [vmem:[#allocation8 + $0x8] sm:$0xff]
    %v186 = vld [vmem:[#allocation8 + $0x10] sm:$0xff]
    %v187 = vld [vmem:[#allocation8 + $0x18] sm:$0xff]
    %v188 = vld [vmem:[#allocation8 + $0x20] sm:$0xff]
    %v189 = vld [vmem:[#allocation8 + $0x28] sm:$0xff]
    %v190 = vld [vmem:[#allocation8 + $0x30] sm:$0xff]
    %v191 = vld [vmem:[#allocation8 + $0x38] sm:$0xff]
    %v192 = vld [vmem:[#allocation8 + $0x40] sm:$0xff]
    %v193 = vld [vmem:[#allocation8 + $0x48] sm:$0xff]
    %v194 = vld [vmem:[#allocation8 + $0x50] sm:$0xff]
    %v195 = vld [vmem:[#allocation8 + $0x58] sm:$0xff]
    %v196 = vld [vmem:[#allocation8 + $0x60] sm:$0xff]
    %v197 = vld [vmem:[#allocation8 + $0x68] sm:$0xff]
    %v198 = vld [vmem:[#allocation8 + $0x70] sm:$0xff]
    %v199 = vld [vmem:[#allocation8 + $0x78] sm:$0xff]
    %v200 = vld [vmem:[#allocation8 + $0x80] sm:$0xff]
    %v201 = vld [vmem:[#allocation8 + $0x88] sm:$0xff]
    %v202 = vld [vmem:[#allocation8 + $0x90] sm:$0xff]
    %v203 = vld [vmem:[#allocation8 + $0x98] sm:$0xff]
    %v204 = vld [vmem:[#allocation8 + $0xa0] sm:$0xff]
    %v205 = vld [vmem:[#allocation8 + $0xa8] sm:$0xff]
    %v206 = vld [vmem:[#allocation8 + $0xb0] sm:$0xff]
    %v207 = vld [vmem:[#allocation8 + $0xb8] sm:$0xff]
    %v208 = vld [vmem:[#allocation8 + $0xc0] sm:$0xff]
    %v209 = vld [vmem:[#allocation8 + $0xc8] sm:$0xff]
    %v210 = vld [vmem:[#allocation8 + $0xd0] sm:$0xff]
    %v211 = vld [vmem:[#allocation8 + $0xd8] sm:$0xff]
    %v212 = vld [vmem:[#allocation8 + $0xe0] sm:$0xff]
    %v213 = vld [vmem:[#allocation8 + $0xe8] sm:$0xff]
    %v214 = vld [vmem:[#allocation8 + $0xf0] sm:$0xff]
    %v215 = vld [vmem:[#allocation8 + $0xf8] sm:$0xff]
    %v216 = vld [vmem:[%s4] sm:$0x1]
    %v218 = vperm.slane %v216, 0
    %220 = vmatpush.msra.mxu0 %v199
    %221 = vmatpush.msra.mxu0 %v198
    %222 = vmatpush.msra.mxu0 %v197
    %223 = vmatpush.msra.mxu0 %v196
    %224 = vmatpush.msra.mxu0 %v195
    %225 = vmatpush.msra.mxu0 %v194
    %226 = vmatpush.msra.mxu0 %v193
    %227 = vmatpush.msra.mxu0 %v192
    %228 = vmatpush.msra.mxu0 %v191
    %229 = vmatpush.msra.mxu0 %v190
    %230 = vmatpush.msra.mxu0 %v189
    %231 = vmatpush.msra.mxu0 %v188
    %232 = vmatpush.msra.mxu0 %v187
    %233 = vmatpush.msra.mxu0 %v186
    %234 = vmatpush.msra.mxu0 %v185
    %235 = vmatpush.msra.mxu0 %v184
    %236 = vmatmul.f32.gmra.mxu0 %v182
    %v237 = vpop.f32.mrf.mxu0
    %v238 = vadd.f32 %v218, %v237
    %239 = vdwg.mxu0
    %240 = vmatpush.msra.mxu0 %v215
    %241 = vmatpush.msra.mxu0 %v214
    %242 = vmatpush.msra.mxu0 %v213
    %243 = vmatpush.msra.mxu0 %v212
    %244 = vmatpush.msra.mxu0 %v211
    %245 = vmatpush.msra.mxu0 %v210
    %246 = vmatpush.msra.mxu0 %v209
    %247 = vmatpush.msra.mxu0 %v208
    %248 = vmatpush.msra.mxu0 %v207
    %249 = vmatpush.msra.mxu0 %v206
    %250 = vmatpush.msra.mxu0 %v205
    %251 = vmatpush.msra.mxu0 %v204
    %252 = vmatpush.msra.mxu0 %v203
    %253 = vmatpush.msra.mxu0 %v202
    %254 = vmatpush.msra.mxu0 %v201
    %255 = vmatpush.msra.mxu0 %v200
    %256 = vmatmul.f32.gmra.mxu0 %v183
    %v257 = vpop.f32.mrf.mxu0
    %v258 = vadd.f32 %v238, %v257
    %259 = vdwg.mxu0
    %v260 = vmax.f32 %v258, 0.0
    %v261 = vld [vmem:[#allocation10] sm:$0xff]
    %v262 = vld [vmem:[#allocation10 + $0x8] sm:$0xff]
    %v263 = vld [vmem:[#allocation10 + $0x10] sm:$0xff]
    %v264 = vld [vmem:[#allocation10 + $0x18] sm:$0xff]
    %v265 = vld [vmem:[#allocation10 + $0x20] sm:$0xff]
    %v266 = vld [vmem:[#allocation10 + $0x28] sm:$0xff]
    %v267 = vld [vmem:[#allocation10 + $0x30] sm:$0xff]
    %v268 = vld [vmem:[#allocation10 + $0x38] sm:$0xff]
    %v269 = vld [vmem:[#allocation10 + $0x40] sm:$0xff]
    %v270 = vld [vmem:[#allocation10 + $0x48] sm:$0xff]
    %v271 = vld [vmem:[#allocation10 + $0x50] sm:$0xff]
    %v272 = vld [vmem:[#allocation10 + $0x58] sm:$0xff]
    %v273 = vld [vmem:[#allocation10 + $0x60] sm:$0xff]
    %v274 = vld [vmem:[#allocation10 + $0x68] sm:$0xff]
    %v275 = vld [vmem:[#allocation10 + $0x70] sm:$0xff]
    %v276 = vld [vmem:[#allocation10 + $0x78] sm:$0xff]
    %v277 = vld [vmem:[%s6] sm:$0x1]
    %v279 = vperm.slane %v277, 0
    %281 = vmatpush.msra.mxu0 %v276
    %282 = vmatpush.msra.mxu0 %v275
    %283 = vmatpush.msra.mxu0 %v274
    %284 = vmatpush.msra.mxu0 %v273
    %285 = vmatpush.msra.mxu0 %v272
    %286 = vmatpush.msra.mxu0 %v271
    %287 = vmatpush.msra.mxu0 %v270
    %288 = vmatpush.msra.mxu0 %v269
    %289 = vmatpush.msra.mxu0 %v268
    %290 = vmatpush.msra.mxu0 %v267
    %291 = vmatpush.msra.mxu0 %v266
    %292 = vmatpush.msra.mxu0 %v265
    %293 = vmatpush.msra.mxu0 %v264
    %294 = vmatpush.msra.mxu0 %v263
    %295 = vmatpush.msra.mxu0 %v262
    %296 = vmatpush.msra.mxu0 %v261
    %297 = vmatmul.f32.gmra.mxu0 %v260
    %v298 = vpop.f32.mrf.mxu0
    %v299 = vadd.f32 %v279, %v298
    %300 = vdwg.mxu0
    %v301 = vmax.f32 %v299, 0.0
    %302 = vst [vmem:[#allocation11] sm:$0xff] %v301
    // Predicated region
    $region50: #{tpu_custom_call.1} parent=1 // pred_check
      _
    $region51: #{tpu_custom_call.1} parent=1 // pred_check_branch
      %304 = sbr.rel (0) target = $region53
    $region52: #{tpu_custom_call.1} parent=1 // pred_region
      %306 = vsyncadd [#allocation4], 0
      %s308 = sshll.u32 [#allocation11], 4
      %s309 = int_to_ptr.vmem [resolvable:$true] %s308
      %s310 = sshll.u32 %s7, 4
      %s311 = int_to_ptr.hbm [resolvable:$true] %s310
      %313 = dma.vmem_to_hbm [thread:$0]  %s309, 128, %s311, [#allocation4]
    $region53: #{tpu_custom_call.1} parent=1 // pred_fallthru
      _
    // Predicated region
    $region54: #{tpu_custom_call.1} parent=1 // pred_check
      _
    $region55: #{tpu_custom_call.1} parent=1 // pred_check_branch
      %315 = sbr.rel (0) target = $region57
    $region56: #{tpu_custom_call.1} parent=1 // pred_region
      %317 = dma.done [#allocation4], 128
    $region57: #{tpu_custom_call.1} parent=1 // pred_fallthru
      _
    %318 = vsyncpa [#allocation3], 1
    %319 = vsyncpa [#allocation6], 1
    %320 = vsyncpa [#allocation9], 1
    %321 = vsyncpa [#allocation4], 1

</llo_original>
